<compile_context>
chip_gen: v7x
topology: tpu7x:2x2x1
jax: 0.10.0
libtpu: 0.0.40
codegen_flags: <defaults>
</compile_context>

<pallas_src>
import functools

import jax
import jax.numpy as jnp
from jax.experimental import pallas as pl
from jax.experimental.pallas import tpu as pltpu


# ---------------------------------------------------------------------------
# Generation-aware sizing.
# ---------------------------------------------------------------------------
def _tpu_generation_params():
    """Returns (two_tensorcores, max_block_bytes, vmem_limit_bytes)."""
    kind = ""
    try:
        kind = (getattr(jax.devices()[0], "device_kind", "") or "").lower()
    except Exception:  # pragma: no cover - defensive
        pass
    # Dual-TensorCore parts: v4 / v5p megacore, v7x.
    two_tc = any(tag in kind for tag in ("v4", "v5p", "v7"))

    vmem_bytes = None
    try:
        info = pltpu.get_tpu_info()
        vmem_bytes = getattr(info, "vmem_capacity_bytes", None)
    except Exception:  # pragma: no cover - defensive
        vmem_bytes = None
    if vmem_bytes is None:
        # Conservative (v7x-sized) default when the query is unavailable.
        vmem_bytes = 64 << 20

    if vmem_bytes >= (128 << 20):
        # v5e / v6e: plenty of VMEM -> larger blocks amortize per-step overhead.
        return two_tc, 8 << 20, 64 << 20
    # 64 MiB-class VMEM (v7x): pipeline footprint ~= 4x block (double-buffered
    # input + output) plus resident weights -> keep headroom.
    return two_tc, 6 << 20, 40 << 20


# ---------------------------------------------------------------------------
# Fused single-pass kernel: pool + MLP + excite for a block of Nb images.
# ---------------------------------------------------------------------------
def _ca_fused_kernel(x_ref, w1t_ref, b1_ref, w2t_ref, b2_ref, o_ref, *, inv_hw):
    # Pass 1 over the tile: pooled means only (f32 accumulation via the reduction
    # dtype; the tile itself is never promoted or kept live in vregs).
    mean = jnp.sum(x_ref[...], axis=-1, dtype=jnp.float32) * inv_hw     # (Nb, C)

    # 1x1 convs on a 1x1 map == channel-mixing matmuls (weights pre-cast to f32
    # in the wrapper, so no per-step casts here).
    z1 = jnp.maximum(
        jnp.dot(mean, w1t_ref[...], preferred_element_type=jnp.float32)
        + b1_ref[...], 0.0)                                             # (Nb, C_red)
    z2 = jnp.dot(z1, w2t_ref[...], preferred_element_type=jnp.float32) + b2_ref[...]
    y = jax.nn.sigmoid(z2)                                              # (Nb, C)

    # Pass 2 over the tile: excite multiply at the input dtype.  Reading x_ref
    # again is cheaper than holding the multi-MiB value live across the MLP.
    o_ref[...] = x_ref[...] * y.astype(o_ref.dtype)[:, :, None]


# ---------------------------------------------------------------------------
# Fallback pass 1: tiled f32 spatial-sum reduction (per batch element).
# Lane masking only runs on the last (possibly partial) tile.
# ---------------------------------------------------------------------------
def _spatial_sum_kernel(x_ref, s_ref, *, hw_total, tile_hw, needs_mask):
    k = pl.program_id(1)

    @pl.when(k == 0)
    def _():
        s_ref[...] = jnp.zeros_like(s_ref)

    if not needs_mask:
        x = x_ref[0]                                                    # (C, tile_hw)
        s_ref[...] += jnp.sum(x, axis=-1, dtype=jnp.float32).reshape(1, 1, -1)
    else:
        last = pl.num_programs(1) - 1

        @pl.when(k < last)
        def _():
            x = x_ref[0]
            s_ref[...] += jnp.sum(x, axis=-1, dtype=jnp.float32).reshape(1, 1, -1)

        @pl.when(k == last)
        def _():
            x = x_ref[0]
            lane = jax.lax.broadcasted_iota(jnp.int32, x.shape, 1) + k * tile_hw
            x = jnp.where(lane < hw_total, x, jnp.zeros_like(x))
            s_ref[...] += jnp.sum(x, axis=-1, dtype=jnp.float32).reshape(1, 1, -1)


# ---------------------------------------------------------------------------
# Fallback pass 2: lane-dense elementwise excite multiply (y pre-cast).
# ---------------------------------------------------------------------------
def _excite_mul_kernel(x_ref, y_ref, o_ref):
    # x: (1, C, tile_hw), y: (1, C, 1) -> broadcast over spatial lanes.
    o_ref[...] = x_ref[...] * y_ref[...]


# ---------------------------------------------------------------------------
# Wrapper
# ---------------------------------------------------------------------------
def channel_attention(x_nchw, w1, b1, w2, b2, *,
                      max_block_bytes=None, vmem_limit_bytes=None):
    """ChannelAttention forward.

    x_nchw: (N, C, H, W)
    w1: (C_red, C)  b1: (C_red,) or (C_red, 1)   -- Conv2d(C, C_red, 1)
    w2: (C, C_red)  b2: (C,)     or (C, 1)       -- Conv2d(C_red, C, 1)
    """
    N, C, H, W = x_nchw.shape
    C_red = w1.shape[0]
    HW = H * W
    x = x_nchw.reshape(N, C, HW)

    two_tc, auto_block, auto_vmem = _tpu_generation_params()
    if max_block_bytes is None:
        max_block_bytes = auto_block
    if vmem_limit_bytes is None:
        vmem_limit_bytes = auto_vmem

    # Weights / biases pre-cast to f32 in the wrapper (no per-step casts in-kernel).
    w1t = jnp.transpose(w1.reshape(C_red, C)).astype(jnp.float32)       # (C, C_red)
    w2t = jnp.transpose(w2.reshape(C, C_red)).astype(jnp.float32)       # (C_red, C)
    b1r = b1.reshape(1, C_red).astype(jnp.float32)
    b2r = b2.reshape(1, C).astype(jnp.float32)

    dtype_bytes = jnp.dtype(x.dtype).itemsize
    per_image_bytes = C * HW * dtype_bytes

    if per_image_bytes <= max_block_bytes:
        # ---- Fused single pass -------------------------------------------
        budget_images = max(1, max_block_bytes // per_image_bytes)
        nb = min(N, budget_images)

        # Enough grid steps to pipeline DMA against compute / writeback, and a
        # balanced split across both TensorCores on dual-TC chips.  On single-TC
        # v5e/v6e no batch cap is applied beyond the block budget.
        if N >= 4:
            target_steps = 4
        elif two_tc and N >= 2:
            target_steps = 2
        else:
            target_steps = 1
        steps = min(N, max(pl.cdiv(N, nb), target_steps))
        nb = pl.cdiv(N, steps)
        grid_steps = pl.cdiv(N, nb)
        if two_tc and grid_steps > 1 and grid_steps % 2 == 1 and grid_steps < N:
            # Make the parallel step count even so both TCs get equal work.
            while nb > 1 and pl.cdiv(N, nb) % 2 == 1:
                nb -= 1
            grid_steps = pl.cdiv(N, nb)

        out = pl.pallas_call(
            functools.partial(_ca_fused_kernel, inv_hw=1.0 / HW),
            out_shape=jax.ShapeDtypeStruct((N, C, HW), x.dtype),
            grid_spec=pltpu.PrefetchScalarGridSpec(
                num_scalar_prefetch=0,
                grid=(grid_steps,),
                in_specs=[
                    pl.BlockSpec((nb, C, HW), lambda i: (i, 0, 0)),
                    pl.BlockSpec((C, C_red), lambda i: (0, 0)),
                    pl.BlockSpec((1, C_red), lambda i: (0, 0)),
                    pl.BlockSpec((C_red, C), lambda i: (0, 0)),
                    pl.BlockSpec((1, C), lambda i: (0, 0)),
                ],
                out_specs=pl.BlockSpec((nb, C, HW), lambda i: (i, 0, 0)),
            ),
            compiler_params=pltpu.CompilerParams(
                dimension_semantics=("parallel",),
                vmem_limit_bytes=vmem_limit_bytes),
        )(x, w1t, b1r, w2t, b2r)
        return out.reshape(N, C, H, W)

    # ---- Two-pass fallback for large feature maps -------------------------
    # Lane-dense spatial tiles (multiple of 128).
    tile_hw = max(128, (max_block_bytes // (C * dtype_bytes)) // 128 * 128)
    tile_hw = min(tile_hw, pl.cdiv(HW, 128) * 128)
    n_hw = pl.cdiv(HW, tile_hw)
    needs_mask = (HW % tile_hw) != 0

    # Pass 1: per-(N, C) spatial sums in f32.
    sums = pl.pallas_call(
        functools.partial(_spatial_sum_kernel, hw_total=HW, tile_hw=tile_hw,
                          needs_mask=needs_mask),
        out_shape=jax.ShapeDtypeStruct((N, 1, C), jnp.float32),
        grid_spec=pltpu.PrefetchScalarGridSpec(
            num_scalar_prefetch=0,
            grid=(N, n_hw),
            in_specs=[pl.BlockSpec((1, C, tile_hw), lambda n, k: (n, 0, k))],
            out_specs=pl.BlockSpec((1, 1, C), lambda n, k: (n, 0, 0)),
        ),
        compiler_params=pltpu.CompilerParams(
            dimension_semantics=("parallel", "arbitrary"),
            vmem_limit_bytes=vmem_limit_bytes),
    )(x)

    # Tiny squeeze MLP on (N, C) scalars: negligible, done in plain JAX.
    mean = sums.reshape(N, C) * (1.0 / HW)
    z1 = jax.nn.relu(jnp.dot(mean, w1t) + b1r)
    y = jax.nn.sigmoid(jnp.dot(z1, w2t) + b2r)                          # (N, C)
    y = y.astype(x.dtype).reshape(N, C, 1)                              # pre-cast

    # Pass 2: lane-dense excite multiply.
    out = pl.pallas_call(
        _excite_mul_kernel,
        out_shape=jax.ShapeDtypeStruct((N, C, HW), x.dtype),
        grid_spec=pltpu.PrefetchScalarGridSpec(
            num_scalar_prefetch=0,
            grid=(N, n_hw),
            in_specs=[
                pl.BlockSpec((1, C, tile_hw), lambda n, k: (n, 0, k)),
                pl.BlockSpec((1, C, 1), lambda n, k: (n, 0, 0)),
            ],
            out_specs=pl.BlockSpec((1, C, tile_hw), lambda n, k: (n, 0, k)),
        ),
        compiler_params=pltpu.CompilerParams(
            dimension_semantics=("parallel", "parallel"),
            vmem_limit_bytes=vmem_limit_bytes),
    )(x, y)
    return out.reshape(N, C, H, W)


# ---------------------------------------------------------------------------
# Pure-JAX reference of the PyTorch forward.
# ---------------------------------------------------------------------------
def _reference(x, w1, b1, w2, b2):
    mean = jnp.mean(x, axis=(2, 3), keepdims=True)                      # (N, C, 1, 1)
    z1 = jnp.einsum("rc,ncij->nrij", w1, mean) + b1.reshape(1, -1, 1, 1)
    z1 = jax.nn.relu(z1)
    z2 = jnp.einsum("cr,nrij->ncij", w2, z1) + b2.reshape(1, -1, 1, 1)
    return x * jax.nn.sigmoid(z2)


if __name__ == "__main__":
    # num_feat=32, squeeze_factor=8 -> hidden channels = 4
    N, C, H, W = 2, 32, 16, 16
    C_red = C // 8

    key = jax.random.PRNGKey(0)
    kx, k1, k2, k3, k4 = jax.random.split(key, 5)

    x = jax.random.normal(kx, (N, C, H, W), dtype=jnp.float32)
    w1 = jax.random.normal(k1, (C_red, C), dtype=jnp.float32) * 0.1     # Conv2d(C, C_red, 1)
    b1 = jax.random.normal(k2, (C_red,), dtype=jnp.float32) * 0.1
    w2 = jax.random.normal(k3, (C, C_red), dtype=jnp.float32) * 0.1     # Conv2d(C_red, C, 1)
    b2 = jax.random.normal(k4, (C,), dtype=jnp.float32) * 0.1

    # Fused single-pass path.
    out = jax.block_until_ready(channel_attention(x, w1, b1, w2, b2))
    ref = _reference(x, w1, b1, w2, b2)
    assert out.shape == (N, C, H, W)
    assert jnp.allclose(out, ref, atol=1e-5, rtol=1e-5), "fused path mismatch"

    # Two-pass fallback, HW a multiple of the spatial tile (unmasked accumulate).
    x2 = jax.random.normal(kx, (1, C, 32, 32), dtype=jnp.float32)
    out2 = jax.block_until_ready(
        channel_attention(x2, w1, b1, w2, b2, max_block_bytes=32 * 1024))
    ref2 = _reference(x2, w1, b1, w2, b2)
    assert jnp.allclose(out2, ref2, atol=1e-5, rtol=1e-5), "two-pass path mismatch"

    # Two-pass fallback with a partial last spatial tile (masked accumulate path).
    x3 = jax.random.normal(k1, (1, C, 20, 20), dtype=jnp.float32)
    out3 = jax.block_until_ready(
        channel_attention(x3, w1, b1, w2, b2, max_block_bytes=32 * 1024))
    ref3 = _reference(x3, w1, b1, w2, b2)
    assert jnp.allclose(out3, ref3, atol=1e-5, rtol=1e-5), "masked two-pass mismatch"

    print("KERNEL_OK")
</pallas_src>

<mosaic_0001>
module attributes {stable_mosaic.version = 11 : i64} {
  func.func @_ca_fused_kernel(%arg0: i32, %arg1: memref<2x32x256xf32, #tpu.memory_space<vmem>>, %arg2: memref<32x4xf32, #tpu.memory_space<vmem>>, %arg3: memref<1x4xf32, #tpu.memory_space<vmem>>, %arg4: memref<4x32xf32, #tpu.memory_space<vmem>>, %arg5: memref<1x32xf32, #tpu.memory_space<vmem>>, %arg6: memref<2x32x256xf32, #tpu.memory_space<vmem>>) attributes {dimension_semantics = [#tpu.dimension_semantics<parallel>], iteration_bounds = array<i64: 1>, scalar_prefetch = 0 : i64, scratch_operands = 0 : i64, tpu.core_type = #tpu.core_type<tc>, window_params = [{transform_indices = @transform_0, window_bounds = array<i64: 2, 32, 256>}, {pipeline_mode = #tpu.pipeline_mode<synchronous>, transform_indices = @transform_1, window_bounds = array<i64: 32, 4>}, {pipeline_mode = #tpu.pipeline_mode<synchronous>, transform_indices = @transform_2, window_bounds = array<i64: 1, 4>}, {pipeline_mode = #tpu.pipeline_mode<synchronous>, transform_indices = @transform_3, window_bounds = array<i64: 4, 32>}, {pipeline_mode = #tpu.pipeline_mode<synchronous>, transform_indices = @transform_4, window_bounds = array<i64: 1, 32>}, {transform_indices = @transform_5, window_bounds = array<i64: 2, 32, 256>}]} {
    %c0 = arith.constant 0 : index
    %c0_0 = arith.constant 0 : index
    %c0_1 = arith.constant 0 : index
    %0 = vector.load %arg1[%c0, %c0_0, %c0_1] : memref<2x32x256xf32, #tpu.memory_space<vmem>>, vector<2x32x256xf32>
    %cst = arith.constant dense<0.000000e+00> : vector<2x32xf32>
    %1 = vector.multi_reduction <add>, %0, %cst [2] : vector<2x32x256xf32> to vector<2x32xf32>
    %cst_2 = arith.constant 3.906250e-03 : f32
    %2 = vector.broadcast %cst_2 : f32 to vector<2x32xf32>
    %3 = arith.mulf %1, %2 : vector<2x32xf32>
    %c0_3 = arith.constant 0 : index
    %c0_4 = arith.constant 0 : index
    %4 = vector.load %arg2[%c0_3, %c0_4] : memref<32x4xf32, #tpu.memory_space<vmem>>, vector<32x4xf32>
    %cst_5 = arith.constant dense<0.000000e+00> : vector<2x4xf32>
    %5 = tpu.matmul %3, %4, %cst_5 {dimension_numbers = #tpu.dot_dimension_numbers<[1], [0], [0], [1], [0, 0, 1, 1], [], []>} : vector<2x32xf32>, vector<32x4xf32>, vector<2x4xf32> -> vector<2x4xf32>
    %c0_6 = arith.constant 0 : index
    %c0_7 = arith.constant 0 : index
    %6 = vector.load %arg3[%c0_6, %c0_7] : memref<1x4xf32, #tpu.memory_space<vmem>>, vector<1x4xf32>
    %7 = vector.broadcast %6 : vector<1x4xf32> to vector<2x4xf32>
    %8 = arith.addf %5, %7 : vector<2x4xf32>
    %cst_8 = arith.constant 0.000000e+00 : f32
    %9 = vector.broadcast %cst_8 : f32 to vector<2x4xf32>
    %10 = arith.maximumf %8, %9 : vector<2x4xf32>
    %c0_9 = arith.constant 0 : index
    %c0_10 = arith.constant 0 : index
    %11 = vector.load %arg4[%c0_9, %c0_10] : memref<4x32xf32, #tpu.memory_space<vmem>>, vector<4x32xf32>
    %cst_11 = arith.constant dense<0.000000e+00> : vector<2x32xf32>
    %12 = tpu.matmul %10, %11, %cst_11 {dimension_numbers = #tpu.dot_dimension_numbers<[1], [0], [0], [1], [0, 0, 1, 1], [], []>} : vector<2x4xf32>, vector<4x32xf32>, vector<2x32xf32> -> vector<2x32xf32>
    %c0_12 = arith.constant 0 : index
    %c0_13 = arith.constant 0 : index
    %13 = vector.load %arg5[%c0_12, %c0_13] : memref<1x32xf32, #tpu.memory_space<vmem>>, vector<1x32xf32>
    %14 = vector.broadcast %13 : vector<1x32xf32> to vector<2x32xf32>
    %15 = arith.addf %12, %14 : vector<2x32xf32>
    %16 = arith.negf %15 : vector<2x32xf32>
    %17 = math.exp %16 : vector<2x32xf32>
    %cst_14 = arith.constant 1.000000e+00 : f32
    %18 = vector.broadcast %cst_14 : f32 to vector<2x32xf32>
    %19 = arith.addf %18, %17 : vector<2x32xf32>
    %20 = arith.divf %18, %19 : vector<2x32xf32>
    %c0_15 = arith.constant 0 : index
    %c0_16 = arith.constant 0 : index
    %c0_17 = arith.constant 0 : index
    %21 = vector.load %arg1[%c0_15, %c0_16, %c0_17] : memref<2x32x256xf32, #tpu.memory_space<vmem>>, vector<2x32x256xf32>
    %22 = vector.shape_cast %20 : vector<2x32xf32> to vector<2x32x1xf32>
    %23 = vector.broadcast %22 : vector<2x32x1xf32> to vector<2x32x256xf32>
    %24 = arith.mulf %21, %23 : vector<2x32x256xf32>
    %c0_18 = arith.constant 0 : index
    %c0_19 = arith.constant 0 : index
    %c0_20 = arith.constant 0 : index
    %25 = vector.load %arg6[%c0_18, %c0_19, %c0_20] : memref<2x32x256xf32, #tpu.memory_space<vmem>>, vector<2x32x256xf32>
    tpu.vector_store %arg6[%c0_18, %c0_19, %c0_20], %24 {strides = array<i32>} : memref<2x32x256xf32, #tpu.memory_space<vmem>>, vector<2x32x256xf32>,
    return
  }
  func.func @transform_0(%arg0: i32) -> (i32, i32, i32) {
    %c0_i32 = arith.constant 0 : i32
    %c0_i32_0 = arith.constant 0 : i32
    %c0_i32_1 = arith.constant 0 : i32
    return %arg0, %c0_i32, %c0_i32_0 : i32, i32, i32
  }
  func.func @transform_1(%arg0: i32) -> (i32, i32) {
    %c0_i32 = arith.constant 0 : i32
    %c0_i32_0 = arith.constant 0 : i32
    %c0_i32_1 = arith.constant 0 : i32
    return %c0_i32, %c0_i32_0 : i32, i32
  }
  func.func @transform_2(%arg0: i32) -> (i32, i32) {
    %c0_i32 = arith.constant 0 : i32
    %c0_i32_0 = arith.constant 0 : i32
    %c0_i32_1 = arith.constant 0 : i32
    return %c0_i32, %c0_i32_0 : i32, i32
  }
  func.func @transform_3(%arg0: i32) -> (i32, i32) {
    %c0_i32 = arith.constant 0 : i32
    %c0_i32_0 = arith.constant 0 : i32
    %c0_i32_1 = arith.constant 0 : i32
    return %c0_i32, %c0_i32_0 : i32, i32
  }
  func.func @transform_4(%arg0: i32) -> (i32, i32) {
    %c0_i32 = arith.constant 0 : i32
    %c0_i32_0 = arith.constant 0 : i32
    %c0_i32_1 = arith.constant 0 : i32
    return %c0_i32, %c0_i32_0 : i32, i32
  }
  func.func @transform_5(%arg0: i32) -> (i32, i32, i32) {
    %c0_i32 = arith.constant 0 : i32
    %c0_i32_0 = arith.constant 0 : i32
    %c0_i32_1 = arith.constant 0 : i32
    return %arg0, %c0_i32, %c0_i32_0 : i32, i32, i32
  }
}

</mosaic_0001>

<llo_original>
// kernel: tpu_custom_call.1
$region0: #{tpu_custom_call.1}
  #allocation0 [shape = 'u32[]', space=smem, size = 0x4, offset = 0x4, fixed_abs, tag = 'smem constant byte address 0x4 - core index']
  #allocation1 [shape = 'u32[144,128]{1,0:T(1,128)}', space=vmem, size = 0x12000, scoped, tag = 'internal scratch']
  %s0 = inlined_call_operand.hbm [shape: f32[2,32,256], index: 0, kind: input, shape index: {}]
  %s1 = inlined_call_operand.vmem [shape: f32[32,4], index: 1, kind: input, shape index: {}]
  %s2 = inlined_call_operand.vmem [shape: f32[1,4], index: 2, kind: input, shape index: {}]
  %s3 = inlined_call_operand.vmem [shape: f32[4,32], index: 3, kind: input, shape index: {}]
  %s4 = inlined_call_operand.vmem [shape: f32[1,32], index: 4, kind: input, shape index: {}]
  %s5 = inlined_call_operand.hbm [shape: f32[2,32,256], index: 5, kind: output, shape index: {}]
  %s6 = sld [smem:[#allocation0]]
  $region34: #{tpu_custom_call.1} parent=0
    _
  %s8 = ssub.s32 1, %s6
  %s9 = scalar_select 0, %s8, %s6
  $region1: #{tpu_custom_call.1} parent=0
    #allocation2 [shape = 'u8[65536]{0}', space=vmem, size = 0x10000, scoped, tag = 'input window, operand 0, single buffered']
    #allocation3 [shape = 's32[1]{0}', space=sflag, size = 0x4, scoped, tag = 'scoped memory for tpu_custom_call.1']
    #allocation4 [shape = 's32[1]{0}', space=sflag, size = 0x4, scoped, tag = 'scoped memory for tpu_custom_call.1']
    #allocation5 [shape = 'u8[65536]{0}', space=vmem, size = 0x10000, scoped, tag = 'output window, operand 0, single buffered']
    %10 = vsyncpa [#allocation3], 0
    %11 = vsyncpa [#allocation4], 0
    // Predicated region
    $region2: #{tpu_custom_call.1} parent=1 // pred_check
      _
    $region3: #{tpu_custom_call.1} parent=1 // pred_check_branch
      %13 = sbr.rel (0) target = $region5
    $region4: #{tpu_custom_call.1} parent=1 // pred_region
      %s15 = ssub.s32 2048, 2048
      %16 = vsyncadd [#allocation3], %s15
      %s17 = sshll.u32 [#allocation2], 4
      %s18 = int_to_ptr.vmem [resolvable:$true] %s17
      %23 = dma.hbm_to_vmem [thread:$0]  %s0, 2048, %s18, [#allocation3], 256, 256, 16
    $region5: #{tpu_custom_call.1} parent=1 // pred_fallthru
      _
    // Predicated region
    $region6: #{tpu_custom_call.1} parent=1 // pred_check
      _
    $region7: #{tpu_custom_call.1} parent=1 // pred_check_branch
      %25 = sbr.rel (0) target = $region9
    $region8: #{tpu_custom_call.1} parent=1 // pred_region
      _
    $region9: #{tpu_custom_call.1} parent=1 // pred_fallthru
      _
    // Predicated region
    $region10: #{tpu_custom_call.1} parent=1 // pred_check
      _
    $region11: #{tpu_custom_call.1} parent=1 // pred_check_branch
      %27 = sbr.rel (0) target = $region13
    $region12: #{tpu_custom_call.1} parent=1 // pred_region
      _
    $region13: #{tpu_custom_call.1} parent=1 // pred_fallthru
      _
    // Predicated region
    $region14: #{tpu_custom_call.1} parent=1 // pred_check
      _
    $region15: #{tpu_custom_call.1} parent=1 // pred_check_branch
      %29 = sbr.rel (0) target = $region17
    $region16: #{tpu_custom_call.1} parent=1 // pred_region
      _
    $region17: #{tpu_custom_call.1} parent=1 // pred_fallthru
      _
    // Predicated region
    $region18: #{tpu_custom_call.1} parent=1 // pred_check
      _
    $region19: #{tpu_custom_call.1} parent=1 // pred_check_branch
      %31 = sbr.rel (0) target = $region21
    $region20: #{tpu_custom_call.1} parent=1 // pred_region
      _
    $region21: #{tpu_custom_call.1} parent=1 // pred_fallthru
      _
    // Predicated region
    $region22: #{tpu_custom_call.1} parent=1 // pred_check
      _
    $region23: #{tpu_custom_call.1} parent=1 // pred_check_branch
      %33 = sbr.rel (0) target = $region25
    $region24: #{tpu_custom_call.1} parent=1 // pred_region
      %34 = dma.done [#allocation3], 2048
    $region25: #{tpu_custom_call.1} parent=1 // pred_fallthru
      _
    %v35 = vld [vmem:[#allocation2] sm:$0xff]
    %v36 = vld [vmem:[#allocation2 + $0x8] sm:$0xff]
    %v37 = vld [vmem:[#allocation2 + $0x10] sm:$0xff]
    %v38 = vld [vmem:[#allocation2 + $0x18] sm:$0xff]
    %v39 = vld [vmem:[#allocation2 + $0x20] sm:$0xff]
    %v40 = vld [vmem:[#allocation2 + $0x28] sm:$0xff]
    %v41 = vld [vmem:[#allocation2 + $0x30] sm:$0xff]
    %v42 = vld [vmem:[#allocation2 + $0x38] sm:$0xff]
    %v43 = vld [vmem:[#allocation2 + $0x40] sm:$0xff]
    %v44 = vld [vmem:[#allocation2 + $0x48] sm:$0xff]
    %v45 = vld [vmem:[#allocation2 + $0x50] sm:$0xff]
    %v46 = vld [vmem:[#allocation2 + $0x58] sm:$0xff]
    %v47 = vld [vmem:[#allocation2 + $0x60] sm:$0xff]
    %v48 = vld [vmem:[#allocation2 + $0x68] sm:$0xff]
    %v49 = vld [vmem:[#allocation2 + $0x70] sm:$0xff]
    %v50 = vld [vmem:[#allocation2 + $0x78] sm:$0xff]
    %v51 = vadd.f32 %v35, %v36
    %52 = vadd.xlane.f32.xlu0 %v51
    %v53 = vpop.xlane.xlu0 %52
    %v54 = vadd.f32 %v37, %v38
    %55 = vadd.xlane.f32.xlu0 %v54
    %v56 = vpop.xlane.xlu0 %55
    %v57 = vadd.f32 %v39, %v40
    %58 = vadd.xlane.f32.xlu0 %v57
    %v59 = vpop.xlane.xlu0 %58
    %v60 = vadd.f32 %v41, %v42
    %61 = vadd.xlane.f32.xlu0 %v60
    %v62 = vpop.xlane.xlu0 %61
    %v63 = vadd.f32 %v43, %v44
    %64 = vadd.xlane.f32.xlu0 %v63
    %v65 = vpop.xlane.xlu0 %64
    %v66 = vadd.f32 %v45, %v46
    %67 = vadd.xlane.f32.xlu0 %v66
    %v68 = vpop.xlane.xlu0 %67
    %v69 = vadd.f32 %v47, %v48
    %70 = vadd.xlane.f32.xlu0 %v69
    %v71 = vpop.xlane.xlu0 %70
    %v72 = vadd.f32 %v49, %v50
    %73 = vadd.xlane.f32.xlu0 %v72
    %v74 = vpop.xlane.xlu0 %73
    %v75 = vmul.f32 %v53, 0.00390625
    %v76 = vmul.f32 %v56, 0.00390625
    %v77 = vmul.f32 %v59, 0.00390625
    %v78 = vmul.f32 %v62, 0.00390625
    %v79 = vmul.f32 %v65, 0.00390625
    %v80 = vmul.f32 %v68, 0.00390625
    %v81 = vmul.f32 %v71, 0.00390625
    %v82 = vmul.f32 %v74, 0.00390625
    %v83 = vld [vmem:[%s1] sm:$0xff]
    %v84 = vld [vmem:[%s1 + $0x8] sm:$0xff]
    %v85 = vld [vmem:[%s1 + $0x10] sm:$0xff]
    %v86 = vld [vmem:[%s1 + $0x18] sm:$0xff]
    %v87 = vld [vmem:[%s2] sm:$0x1]
    %v89 = vlaneseq
    %v90 = vshrl.u32 %v89, 7
    %v91 = vsub.s32 0, %v90
    %v92 = vrot.slane %v87, %v91
    %v102 = vlaneseq
    %v103 = vand.u32 %v102, 127
    %v104 = vlaneseq
    %v105 = vshrl.u32 %v104, 7
    %v106 = vsub.s32 %v103, %v105
    %v107 = vrot.slane %v75, %v106
    %v108 = vadd.s32 %v103, 4294967288
    %v109 = vlaneseq
    %v110 = vshrl.u32 %v109, 7
    %v111 = vsub.s32 %v108, %v110
    %v112 = vrot.slane %v76, %v111
    %vm113 = vcmask 130112
    %v114 = vsel %vm113, %v112, %v107
    %v115 = vadd.s32 %v103, 4294967280
    %v116 = vlaneseq
    %v117 = vshrl.u32 %v116, 7
    %v118 = vsub.s32 %v115, %v117
    %v119 = vrot.slane %v77, %v118
    %vm120 = vcmask 195712
    %v121 = vsel %vm120, %v119, %v114
    %v122 = vadd.s32 %v103, 4294967272
    %v123 = vlaneseq
    %v124 = vshrl.u32 %v123, 7
    %v125 = vsub.s32 %v122, %v124
    %v126 = vrot.slane %v78, %v125
    %vm127 = vcmask 261312
    %v128 = vsel %vm127, %v126, %v121
    %v129 = vlaneseq
    %v130 = vshrl.u32 %v129, 7
    %v131 = vsub.s32 %v103, %v130
    %v132 = vrot.slane %v79, %v131
    %v133 = vlaneseq
    %v134 = vshrl.u32 %v133, 7
    %v135 = vsub.s32 %v108, %v134
    %v136 = vrot.slane %v80, %v135
    %v137 = vsel %vm113, %v136, %v132
    %v138 = vlaneseq
    %v139 = vshrl.u32 %v138, 7
    %v140 = vsub.s32 %v115, %v139
    %v141 = vrot.slane %v81, %v140
    %v142 = vsel %vm120, %v141, %v137
    %v143 = vlaneseq
    %v144 = vshrl.u32 %v143, 7
    %v145 = vsub.s32 %v122, %v144
    %v146 = vrot.slane %v82, %v145
    %v147 = vsel %vm127, %v146, %v142
    %vm148 = vcmask 1041409
    %v149 = vsel %vm148, %v147, %v128
    %vm150 = vcmask 261120
    %v151 = vsel %vm150, %v149, 0
    %153 = vmatprep.subr.mxu0 0.0
    %154 = vmatpush1.msra.mxu0 %v83
    %155 = vmatprep.subr.mxu0 0.0
    %156 = vmatpush1.msra.mxu0 %v84
    %157 = vmatprep.subr.mxu0 0.0
    %158 = vmatpush1.msra.mxu0 %v85
    %159 = vmatprep.subr.mxu0 0.0
    %160 = vmatpush1.msra.mxu0 %v86
    %161 = vmatprep.subr.mxu0 0.0
    %162 = vmatpush1.msra.mxu0 0.0
    %163 = vmatprep.subr.mxu0 0.0
    %164 = vmatpush1.msra.mxu0 0.0
    %165 = vmatprep.subr.mxu0 0.0
    %166 = vmatpush1.msra.mxu0 0.0
    %167 = vmatprep.subr.mxu0 0.0
    %168 = vmatpush1.msra.mxu0 0.0
    %169 = vmatprep.subr.mxu0 0.0
    %170 = vmatpush1.msra.mxu0 0.0
    %171 = vmatprep.subr.mxu0 0.0
    %172 = vmatpush1.msra.mxu0 0.0
    %173 = vmatprep.subr.mxu0 0.0
    %174 = vmatpush1.msra.mxu0 0.0
    %175 = vmatprep.subr.mxu0 0.0
    %176 = vmatpush1.msra.mxu0 0.0
    %177 = vmatprep.subr.mxu0 0.0
    %178 = vmatpush1.msra.mxu0 0.0
    %179 = vmatprep.subr.mxu0 0.0
    %180 = vmatpush1.msra.mxu0 0.0
    %181 = vmatprep.subr.mxu0 0.0
    %182 = vmatpush1.msra.mxu0 0.0
    %183 = vmatprep.subr.mxu0 0.0
    %184 = vmatpush1.msra.mxu0 0.0
    %185 = vmatprep.subr.mxu0 0.0
    %186 = vmatpush1.msra.mxu0 0.0
    %187 = vmatprep.subr.mxu0 0.0
    %188 = vmatpush1.msra.mxu0 0.0
    %189 = vmatprep.subr.mxu0 0.0
    %190 = vmatpush1.msra.mxu0 0.0
    %191 = vmatprep.subr.mxu0 0.0
    %192 = vmatpush1.msra.mxu0 0.0
    %193 = vmatprep.subr.mxu0 0.0
    %194 = vmatpush1.msra.mxu0 0.0
    %195 = vmatprep.subr.mxu0 0.0
    %196 = vmatpush1.msra.mxu0 0.0
    %197 = vmatprep.subr.mxu0 0.0
    %198 = vmatpush1.msra.mxu0 0.0
    %199 = vmatprep.subr.mxu0 0.0
    %200 = vmatpush1.msra.mxu0 0.0
    %201 = vmatprep.subr.mxu0 0.0
    %202 = vmatpush1.msra.mxu0 0.0
    %203 = vmatprep.subr.mxu0 0.0
    %204 = vmatpush1.msra.mxu0 0.0
    %205 = vmatprep.subr.mxu0 0.0
    %206 = vmatpush1.msra.mxu0 0.0
    %207 = vmatprep.subr.mxu0 0.0
    %208 = vmatpush1.msra.mxu0 0.0
    %209 = vmatprep.subr.mxu0 0.0
    %210 = vmatpush1.msra.mxu0 0.0
    %211 = vmatprep.subr.mxu0 0.0
    %212 = vmatpush1.msra.mxu0 0.0
    %213 = vmatprep.subr.mxu0 0.0
    %214 = vmatpush1.msra.mxu0 0.0
    %215 = vmatprep.subr.mxu0 0.0
    %216 = vmatpush1.msra.mxu0 0.0
    %217 = vmatprep.mubr.f32.mxu0 0.0
    %218 = vmatmul.mubr.f32.gmra.mrb[0].mxu0 %v151
    %v219 = vpop.f32.mrb[0].mxu0
    %v220 = vadd.f32 %v92, %v219
    %v221 = vpop.f32.mrb[0].mxu0
    %222 = vdwg.mxu0
    %v223 = vmax.f32 %v220, 0.0
    %v224 = vld [vmem:[%s3] sm:$0xf]
    %v225 = vld [vmem:[%s4] sm:$0x1]
    %v227 = vlaneseq
    %v228 = vshrl.u32 %v227, 7
    %v229 = vsub.s32 0, %v228
    %v230 = vrot.slane %v225, %v229
    %vm232 = vcmask 31744
    %v234 = vsel %vm232, %v223, 0
    %vm236 = vcmask 1043456
    %v238 = vsel %vm236, %v224, 0
    %240 = vmatprep.subr.mxu0 0.0
    %241 = vmatpush1.msra.mxu0 %v238
    %242 = vmatprep.subr.mxu0 0.0
    %243 = vmatpush1.msra.mxu0 0.0
    %244 = vmatprep.subr.mxu0 0.0
    %245 = vmatpush1.msra.mxu0 0.0
    %246 = vmatprep.subr.mxu0 0.0
    %247 = vmatpush1.msra.mxu0 0.0
    %248 = vmatprep.subr.mxu0 0.0
    %249 = vmatpush1.msra.mxu0 0.0
    %250 = vmatprep.subr.mxu0 0.0
    %251 = vmatpush1.msra.mxu0 0.0
    %252 = vmatprep.subr.mxu0 0.0
    %253 = vmatpush1.msra.mxu0 0.0
    %254 = vmatprep.subr.mxu0 0.0
    %255 = vmatpush1.msra.mxu0 0.0
    %256 = vmatprep.subr.mxu0 0.0
    %257 = vmatpush1.msra.mxu0 0.0
    %258 = vmatprep.subr.mxu0 0.0
    %259 = vmatpush1.msra.mxu0 0.0
    %260 = vmatprep.subr.mxu0 0.0
    %261 = vmatpush1.msra.mxu0 0.0
    %262 = vmatprep.subr.mxu0 0.0
    %263 = vmatpush1.msra.mxu0 0.0
    %264 = vmatprep.subr.mxu0 0.0
    %265 = vmatpush1.msra.mxu0 0.0
    %266 = vmatprep.subr.mxu0 0.0
    %267 = vmatpush1.msra.mxu0 0.0
    %268 = vmatprep.subr.mxu0 0.0
    %269 = vmatpush1.msra.mxu0 0.0
    %270 = vmatprep.subr.mxu0 0.0
    %271 = vmatpush1.msra.mxu0 0.0
    %272 = vmatprep.subr.mxu0 0.0
    %273 = vmatpush1.msra.mxu0 0.0
    %274 = vmatprep.subr.mxu0 0.0
    %275 = vmatpush1.msra.mxu0 0.0
    %276 = vmatprep.subr.mxu0 0.0
    %277 = vmatpush1.msra.mxu0 0.0
    %278 = vmatprep.subr.mxu0 0.0
    %279 = vmatpush1.msra.mxu0 0.0
    %280 = vmatprep.subr.mxu0 0.0
    %281 = vmatpush1.msra.mxu0 0.0
    %282 = vmatprep.subr.mxu0 0.0
    %283 = vmatpush1.msra.mxu0 0.0
    %284 = vmatprep.subr.mxu0 0.0
    %285 = vmatpush1.msra.mxu0 0.0
    %286 = vmatprep.subr.mxu0 0.0
    %287 = vmatpush1.msra.mxu0 0.0
    %288 = vmatprep.subr.mxu0 0.0
    %289 = vmatpush1.msra.mxu0 0.0
    %290 = vmatprep.subr.mxu0 0.0
    %291 = vmatpush1.msra.mxu0 0.0
    %292 = vmatprep.subr.mxu0 0.0
    %293 = vmatpush1.msra.mxu0 0.0
    %294 = vmatprep.subr.mxu0 0.0
    %295 = vmatpush1.msra.mxu0 0.0
    %296 = vmatprep.subr.mxu0 0.0
    %297 = vmatpush1.msra.mxu0 0.0
    %298 = vmatprep.subr.mxu0 0.0
    %299 = vmatpush1.msra.mxu0 0.0
    %300 = vmatprep.subr.mxu0 0.0
    %301 = vmatpush1.msra.mxu0 0.0
    %302 = vmatprep.subr.mxu0 0.0
    %303 = vmatpush1.msra.mxu0 0.0
    %304 = vmatprep.mubr.f32.mxu0 0.0
    %305 = vmatmul.mubr.f32.gmra.mrb[0].mxu0 %v234
    %v306 = vpop.f32.mrb[0].mxu0
    %v307 = vadd.f32 %v230, %v306
    %v308 = vpop.f32.mrb[0].mxu0
    %309 = vdwg.mxu0
    %v310 = vxor.u32 %v307, 2147483648
    %v311 = vmul.f32 %v310, 1.442695
    %v312 = vpow.pop %v311
    %v313 = vadd.f32 %v312, 1.0
    %v314 = vrcp.pop %v313
    %v315 = vmul.f32 1.0, %v314
    %v316 = vlaneseq
    %v317 = vshrl.u32 %v316, 7
    %v318 = vsub.s32 0, %v317
    %v319 = vrot.slane %v315, %v318
    %321 = vbcast.lane.b32.xlu0 %v319, 256
    %v322 = vpop.permute.xlu0 %321
    %s324 = sor.u32 256, 8
    %325 = vbcast.lane.b32.xlu0 %v319, %s324
    %v326 = vpop.permute.xlu0 %325
    %s328 = sor.u32 256, 16
    %329 = vbcast.lane.b32.xlu0 %v319, %s328
    %v330 = vpop.permute.xlu0 %329
    %s332 = sor.u32 256, 24
    %333 = vbcast.lane.b32.xlu0 %v319, %s332
    %v334 = vpop.permute.xlu0 %333
    %v335 = vlaneseq
    %v336 = vshrl.u32 %v335, 7
    %v337 = vsub.s32 1, %v336
    %v338 = vrot.slane %v315, %v337
    %340 = vbcast.lane.b32.xlu0 %v338, 256
    %v341 = vpop.permute.xlu0 %340
    %s343 = sor.u32 256, 8
    %344 = vbcast.lane.b32.xlu0 %v338, %s343
    %v345 = vpop.permute.xlu0 %344
    %s347 = sor.u32 256, 16
    %348 = vbcast.lane.b32.xlu0 %v338, %s347
    %v349 = vpop.permute.xlu0 %348
    %s351 = sor.u32 256, 24
    %352 = vbcast.lane.b32.xlu0 %v338, %s351
    %v353 = vpop.permute.xlu0 %352
    %v354 = vmul.f32 %v35, %v322
    %v355 = vmul.f32 %v36, %v322
    %v356 = vmul.f32 %v37, %v326
    %v357 = vmul.f32 %v38, %v326
    %v358 = vmul.f32 %v39, %v330
    %v359 = vmul.f32 %v40, %v330
    %v360 = vmul.f32 %v41, %v334
    %v361 = vmul.f32 %v42, %v334
    %v362 = vmul.f32 %v43, %v341
    %v363 = vmul.f32 %v44, %v341
    %v364 = vmul.f32 %v45, %v345
    %v365 = vmul.f32 %v46, %v345
    %v366 = vmul.f32 %v47, %v349
    %v367 = vmul.f32 %v48, %v349
    %v368 = vmul.f32 %v49, %v353
    %v369 = vmul.f32 %v50, %v353
    %370 = vst [vmem:[#allocation5] sm:$0xff] %v354
    %371 = vst [vmem:[#allocation5 + $0x8] sm:$0xff] %v355
    %372 = vst [vmem:[#allocation5 + $0x10] sm:$0xff] %v356
    %373 = vst [vmem:[#allocation5 + $0x18] sm:$0xff] %v357
    %374 = vst [vmem:[#allocation5 + $0x20] sm:$0xff] %v358
    %375 = vst [vmem:[#allocation5 + $0x28] sm:$0xff] %v359
    %376 = vst [vmem:[#allocation5 + $0x30] sm:$0xff] %v360
    %377 = vst [vmem:[#allocation5 + $0x38] sm:$0xff] %v361
    %378 = vst [vmem:[#allocation5 + $0x40] sm:$0xff] %v362
    %379 = vst [vmem:[#allocation5 + $0x48] sm:$0xff] %v363
    %380 = vst [vmem:[#allocation5 + $0x50] sm:$0xff] %v364
    %381 = vst [vmem:[#allocation5 + $0x58] sm:$0xff] %v365
    %382 = vst [vmem:[#allocation5 + $0x60] sm:$0xff] %v366
    %383 = vst [vmem:[#allocation5 + $0x68] sm:$0xff] %v367
    %384 = vst [vmem:[#allocation5 + $0x70] sm:$0xff] %v368
    %385 = vst [vmem:[#allocation5 + $0x78] sm:$0xff] %v369
    // Predicated region
    $region26: #{tpu_custom_call.1} parent=1 // pred_check
      _
    $region27: #{tpu_custom_call.1} parent=1 // pred_check_branch
      %387 = sbr.rel (0) target = $region29
    $region28: #{tpu_custom_call.1} parent=1 // pred_region
      %s389 = ssub.s32 2048, 2048
      %390 = vsyncadd [#allocation4], %s389
      %s391 = sshll.u32 [#allocation5], 4
      %s392 = int_to_ptr.vmem [resolvable:$true] %s391
      %397 = dma.vmem_to_hbm [thread:$0]  %s392, 2048, %s5, [#allocation4], 256, 256, 16
    $region29: #{tpu_custom_call.1} parent=1 // pred_fallthru
      _
    // Predicated region
    $region30: #{tpu_custom_call.1} parent=1 // pred_check
      _
    $region31: #{tpu_custom_call.1} parent=1 // pred_check_branch
      %399 = sbr.rel (0) target = $region33
    $region32: #{tpu_custom_call.1} parent=1 // pred_region
      %400 = dma.done [#allocation4], 2048
    $region33: #{tpu_custom_call.1} parent=1 // pred_fallthru
      _
    %401 = vsyncpa [#allocation3], 1
    %402 = vsyncpa [#allocation4], 1

</llo_original>
